<compile_context>
chip_gen: v7x
topology: tpu7x:2x2x1
jax: 0.10.0
libtpu: 0.0.40
codegen_flags: <defaults>
</compile_context>

<pallas_src>
import jax
import jax.numpy as jnp
from jax.experimental import pallas as pl
from jax.experimental.pallas import tpu as pltpu

_LANE = 128
_SUBLANE = 8


def _scaled_sigmoid_kernel(p_ref, lo_ref, hi_ref, o_ref):
    p = p_ref[...]
    lo = lo_ref[...]
    hi = hi_ref[...]
    # sigmoid(x) == 0.5 * (tanh(x / 2) + 1): one EUP transcendental per vreg.
    sig = 0.5 * (jnp.tanh(0.5 * p) + 1.0)
    o_ref[...] = lo + (hi - lo) * sig


def learnable_params_forward(learnable_params, min_values, max_values,
                             *, max_cols=1024, max_row_tile=256):
    """learnable_params, min_values, max_values: 1-D arrays of length N.

    Returns: min + (max - min) * sigmoid(params), shape (N,), float32.
    """
    n = learnable_params.shape[0]

    # Lane-dense layout: last dim is a multiple of 128 (capped at max_cols).
    cols = min(max_cols, -(-n // _LANE) * _LANE)
    rows = -(-n // cols)  # ceil-div
    if rows > max_row_tile:
        # Large-N path: tile rows in multiples of 8 sublanes, pipelined grid.
        row_tile = max_row_tile
        rows = -(-rows // row_tile) * row_tile  # pad rows to tile multiple
    else:
        # Small-N path: one full-extent block (allowed even if rows % 8 != 0).
        row_tile = rows
    total = rows * cols
    grid = (rows // row_tile,)

    def pad2d(x):
        x = x.astype(jnp.float32).reshape(-1)
        if total != n:
            x = jnp.pad(x, (0, total - n))
        return x.reshape(rows, cols)

    p2 = pad2d(learnable_params)
    lo2 = pad2d(min_values)
    hi2 = pad2d(max_values)

    spec = pl.BlockSpec((row_tile, cols), lambda i: (i, 0))
    out = pl.pallas_call(
        _scaled_sigmoid_kernel,
        out_shape=jax.ShapeDtypeStruct((rows, cols), jnp.float32),
        grid=grid,
        in_specs=[spec, spec, spec],
        out_specs=spec,
        compiler_params=pltpu.CompilerParams(
            dimension_semantics=("parallel",)),
    )(p2, lo2, hi2)
    return out.reshape(-1)[:n]


if __name__ == "__main__":
    key = jax.random.PRNGKey(0)

    def make_inputs(k, n):
        k1, k2, k3 = jax.random.split(k, 3)
        p = jax.random.normal(k1, (n,), dtype=jnp.float32)
        lo = jax.random.uniform(k2, (n,), minval=0.0, maxval=1.0,
                                dtype=jnp.float32)
        hi = lo + jax.random.uniform(k3, (n,), minval=0.5, maxval=2.0,
                                     dtype=jnp.float32)
        return p, lo, hi

    # 1) The module's actual workload size: N = 8 learnable scalar params.
    N = 8
    k_small, k_big = jax.random.split(key)
    p, lo, hi = make_inputs(k_small, N)
    out = jax.block_until_ready(learnable_params_forward(p, lo, hi))
    ref = lo + (hi - lo) * jax.nn.sigmoid(p)
    assert out.shape == (N,)
    assert jnp.allclose(out, ref, atol=1e-5, rtol=1e-5)

    # 2) A larger, non-multiple-of-128 size to exercise padding + lane-dense
    #    tiling on the same code path.
    N2 = 3000
    p2, lo2, hi2 = make_inputs(k_big, N2)
    out2 = jax.block_until_ready(learnable_params_forward(p2, lo2, hi2))
    ref2 = lo2 + (hi2 - lo2) * jax.nn.sigmoid(p2)
    assert out2.shape == (N2,)
    assert jnp.allclose(out2, ref2, atol=1e-5, rtol=1e-5)

    # TODO(synk): param_info() (order/default metadata) is pure Python
    # bookkeeping, no kernel equivalent needed.
    print("KERNEL_OK")
</pallas_src>

<mosaic_0001>
module attributes {stable_mosaic.version = 11 : i64} {
  func.func @_scaled_sigmoid_kernel(%arg0: i32, %arg1: memref<1x128xf32, #tpu.memory_space<vmem>>, %arg2: memref<1x128xf32, #tpu.memory_space<vmem>>, %arg3: memref<1x128xf32, #tpu.memory_space<vmem>>, %arg4: memref<1x128xf32, #tpu.memory_space<vmem>>) attributes {dimension_semantics = [#tpu.dimension_semantics<parallel>], iteration_bounds = array<i64: 1>, scalar_prefetch = 0 : i64, scratch_operands = 0 : i64, tpu.core_type = #tpu.core_type<tc>, window_params = [{transform_indices = @transform_0, window_bounds = array<i64: 1, 128>}, {transform_indices = @transform_1, window_bounds = array<i64: 1, 128>}, {transform_indices = @transform_2, window_bounds = array<i64: 1, 128>}, {transform_indices = @transform_3, window_bounds = array<i64: 1, 128>}]} {
    %c0 = arith.constant 0 : index
    %c0_0 = arith.constant 0 : index
    %0 = vector.load %arg1[%c0, %c0_0] : memref<1x128xf32, #tpu.memory_space<vmem>>, vector<1x128xf32>
    %c0_1 = arith.constant 0 : index
    %c0_2 = arith.constant 0 : index
    %1 = vector.load %arg2[%c0_1, %c0_2] : memref<1x128xf32, #tpu.memory_space<vmem>>, vector<1x128xf32>
    %c0_3 = arith.constant 0 : index
    %c0_4 = arith.constant 0 : index
    %2 = vector.load %arg3[%c0_3, %c0_4] : memref<1x128xf32, #tpu.memory_space<vmem>>, vector<1x128xf32>
    %cst = arith.constant 5.000000e-01 : f32
    %3 = vector.broadcast %cst : f32 to vector<1x128xf32>
    %4 = arith.mulf %3, %0 : vector<1x128xf32>
    %5 = math.tanh %4 : vector<1x128xf32>
    %cst_5 = arith.constant 1.000000e+00 : f32
    %6 = vector.broadcast %cst_5 : f32 to vector<1x128xf32>
    %7 = arith.addf %5, %6 : vector<1x128xf32>
    %cst_6 = arith.constant 5.000000e-01 : f32
    %8 = vector.broadcast %cst_6 : f32 to vector<1x128xf32>
    %9 = arith.mulf %8, %7 : vector<1x128xf32>
    %10 = arith.subf %2, %1 : vector<1x128xf32>
    %11 = arith.mulf %10, %9 : vector<1x128xf32>
    %12 = arith.addf %1, %11 : vector<1x128xf32>
    %c0_7 = arith.constant 0 : index
    %c0_8 = arith.constant 0 : index
    %13 = vector.load %arg4[%c0_7, %c0_8] : memref<1x128xf32, #tpu.memory_space<vmem>>, vector<1x128xf32>
    tpu.vector_store %arg4[%c0_7, %c0_8], %12 {strides = array<i32>} : memref<1x128xf32, #tpu.memory_space<vmem>>, vector<1x128xf32>,
    return
  }
  func.func @transform_0(%arg0: i32) -> (i32, i32) {
    %c0_i32 = arith.constant 0 : i32
    %c0_i32_0 = arith.constant 0 : i32
    return %arg0, %c0_i32 : i32, i32
  }
  func.func @transform_1(%arg0: i32) -> (i32, i32) {
    %c0_i32 = arith.constant 0 : i32
    %c0_i32_0 = arith.constant 0 : i32
    return %arg0, %c0_i32 : i32, i32
  }
  func.func @transform_2(%arg0: i32) -> (i32, i32) {
    %c0_i32 = arith.constant 0 : i32
    %c0_i32_0 = arith.constant 0 : i32
    return %arg0, %c0_i32 : i32, i32
  }
  func.func @transform_3(%arg0: i32) -> (i32, i32) {
    %c0_i32 = arith.constant 0 : i32
    %c0_i32_0 = arith.constant 0 : i32
    return %arg0, %c0_i32 : i32, i32
  }
}

</mosaic_0001>

<llo_original>
// kernel: tpu_custom_call.1
$region0: #{tpu_custom_call.1}
  #allocation0 [shape = 'u32[]', space=smem, size = 0x4, offset = 0x4, fixed_abs, tag = 'smem constant byte address 0x4 - core index']
  #allocation1 [shape = 'u32[144,128]{1,0:T(1,128)}', space=vmem, size = 0x12000, scoped, tag = 'internal scratch']
  %s0 = inlined_call_operand.hbm [shape: f32[1,128], index: 0, kind: input, shape index: {}]
  %s1 = inlined_call_operand.vmem [shape: f32[1,128], index: 1, kind: input, shape index: {}]
  %s2 = inlined_call_operand.vmem [shape: f32[1,128], index: 2, kind: input, shape index: {}]
  %s3 = inlined_call_operand.hbm [shape: f32[1,128], index: 3, kind: output, shape index: {}]
  %s4 = sld [smem:[#allocation0]]
  $region26: #{tpu_custom_call.1} parent=0
    _
  %s6 = ssub.s32 1, %s4
  %s7 = scalar_select 0, %s6, %s4
  $region1: #{tpu_custom_call.1} parent=0
    #allocation2 [shape = 'u8[512]{0}', space=vmem, size = 0x400, scoped, tag = 'input window, operand 0, single buffered']
    #allocation3 [shape = 's32[1]{0}', space=sflag, size = 0x4, scoped, tag = 'scoped memory for tpu_custom_call.1']
    #allocation4 [shape = 's32[1]{0}', space=sflag, size = 0x4, scoped, tag = 'scoped memory for tpu_custom_call.1']
    #allocation5 [shape = 'u8[512]{0}', space=vmem, size = 0x400, scoped, tag = 'output window, operand 0, single buffered']
    %8 = vsyncpa [#allocation3], 0
    %9 = vsyncpa [#allocation4], 0
    // Predicated region
    $region2: #{tpu_custom_call.1} parent=1 // pred_check
      _
    $region3: #{tpu_custom_call.1} parent=1 // pred_check_branch
      %11 = sbr.rel (0) target = $region5
    $region4: #{tpu_custom_call.1} parent=1 // pred_region
      %s13 = ssub.s32 16, 16
      %14 = vsyncadd [#allocation3], %s13
      %s16 = sshll.u32 [#allocation2], 4
      %s17 = int_to_ptr.vmem [resolvable:$true] %s16
      %19 = dma.hbm_to_vmem [thread:$0]  %s0, 16, %s17, [#allocation3]
    $region5: #{tpu_custom_call.1} parent=1 // pred_fallthru
      _
    // Predicated region
    $region6: #{tpu_custom_call.1} parent=1 // pred_check
      _
    $region7: #{tpu_custom_call.1} parent=1 // pred_check_branch
      %21 = sbr.rel (0) target = $region9
    $region8: #{tpu_custom_call.1} parent=1 // pred_region
      _
    $region9: #{tpu_custom_call.1} parent=1 // pred_fallthru
      _
    // Predicated region
    $region10: #{tpu_custom_call.1} parent=1 // pred_check
      _
    $region11: #{tpu_custom_call.1} parent=1 // pred_check_branch
      %23 = sbr.rel (0) target = $region13
    $region12: #{tpu_custom_call.1} parent=1 // pred_region
      _
    $region13: #{tpu_custom_call.1} parent=1 // pred_fallthru
      _
    // Predicated region
    $region14: #{tpu_custom_call.1} parent=1 // pred_check
      _
    $region15: #{tpu_custom_call.1} parent=1 // pred_check_branch
      %25 = sbr.rel (0) target = $region17
    $region16: #{tpu_custom_call.1} parent=1 // pred_region
      %26 = dma.done [#allocation3], 16
    $region17: #{tpu_custom_call.1} parent=1 // pred_fallthru
      _
    %v27 = vld [vmem:[#allocation2] sm:$0x1]
    %v28 = vld [vmem:[%s1] sm:$0x1]
    %v29 = vld [vmem:[%s2] sm:$0x1]
    %v30 = vmul.f32 %v27, 0.5
    %v31 = vtanh.pop %v30
    %v32 = vadd.f32 %v31, 1.0
    %v33 = vmul.f32 %v32, 0.5
    %v34 = vsub.f32 %v29, %v28
    %v35 = vmul.f32 %v34, %v33
    %v36 = vadd.f32 %v28, %v35
    %37 = vst [vmem:[#allocation5] sm:$0x1] %v36
    // Predicated region
    $region18: #{tpu_custom_call.1} parent=1 // pred_check
      _
    $region19: #{tpu_custom_call.1} parent=1 // pred_check_branch
      %39 = sbr.rel (0) target = $region21
    $region20: #{tpu_custom_call.1} parent=1 // pred_region
      %s41 = ssub.s32 16, 16
      %42 = vsyncadd [#allocation4], %s41
      %s44 = sshll.u32 [#allocation5], 4
      %s45 = int_to_ptr.vmem [resolvable:$true] %s44
      %47 = dma.vmem_to_hbm [thread:$0]  %s45, 16, %s3, [#allocation4]
    $region21: #{tpu_custom_call.1} parent=1 // pred_fallthru
      _
    // Predicated region
    $region22: #{tpu_custom_call.1} parent=1 // pred_check
      _
    $region23: #{tpu_custom_call.1} parent=1 // pred_check_branch
      %49 = sbr.rel (0) target = $region25
    $region24: #{tpu_custom_call.1} parent=1 // pred_region
      %50 = dma.done [#allocation4], 16
    $region25: #{tpu_custom_call.1} parent=1 // pred_fallthru
      _
    %51 = vsyncpa [#allocation3], 1
    %52 = vsyncpa [#allocation4], 1

</llo_original>
